<compile_context>
chip_gen: v7x
topology: tpu7x:2x2x1
jax: 0.10.0
libtpu: 0.0.40
codegen_flags: <defaults>
</compile_context>

<pallas_src>
import jax
import jax.numpy as jnp
from jax.experimental import pallas as pl
from jax.experimental.pallas import tpu as pltpu


# ----------------------------- in-kernel helpers -----------------------------

def _row_softmax(e):
    """Numerically-stable softmax over the last (lane) axis of a 2-D array."""
    m = jnp.max(e, axis=1, keepdims=True)
    p = jnp.exp(e - m)
    denom = jnp.sum(p, axis=1, keepdims=True)
    return p * pl.reciprocal(denom, approx=True)   # EUP approx reciprocal (perf feedback)


# --------------------------------- kernels -----------------------------------

def _attn_dot_kernel(hid_ref, enc_ref, out_ref):
    # score[l, b] = sum_h hidden[b, h] * enc[l, b, h]
    h = hid_ref[0]                                     # (B, H)
    enc = enc_ref[...]                                 # (L, B, H)  seq-major (as in PyTorch)
    e_lb = jnp.sum(enc * h[None, :, :], axis=2)        # (L, B)     lane reduction over H
    out_ref[...] = _row_softmax(e_lb.T)                # (B, L)     softmax over L


def _attn_general_kernel(hid_ref, enc_ref, w_ref, b_ref, out_ref):
    # score[l,b] = sum_j h[b,j] * (enc[l,b] @ W.T + b)[j]
    #            = sum_i enc[l,b,i] * (h @ W)[b,i] + (h . b)[b]
    # (identical math, refactored so the only matmul is (B,H)@(H,H) and the raw torch-layout
    #  weight W (out,in) needs no transpose anywhere)
    h = hid_ref[0]                                                        # (B, H)
    enc = enc_ref[...]                                                    # (L, B, H)
    hw = jnp.dot(h, w_ref[...], preferred_element_type=jnp.float32)       # (B, H)
    hb = jnp.sum(h * b_ref[...], axis=1, keepdims=True)                   # (B, 1)
    e_lb = jnp.sum(enc * hw[None, :, :], axis=2)                          # (L, B)
    out_ref[...] = _row_softmax(e_lb.T + hb)                              # (B, L)


def _attn_concat_kernel(hid_ref, enc_ref, wc_ref, bc_ref, v_ref, out_ref):
    # energy[l,b,:] = tanh([h[b], enc[l,b]] @ Wc.T + bc);  score[l,b] = v . energy[l,b,:]
    # The lane-axis concatenate is avoided by splitting Wc into its hidden/encoder halves.
    B = hid_ref.shape[1]
    H = hid_ref.shape[2]
    L = enc_ref.shape[0]

    h = hid_ref[0]                                                        # (B, H)
    enc = enc_ref[...]                                                    # (L, B, H)
    wc = wc_ref[...]                                                      # (H, 2H) torch (out,in)
    wch_t = wc[:, :H].T                                                   # (H, H), hoisted
    wce_t = wc[:, H:].T                                                   # (H, H), hoisted
    v = v_ref[...]                                                        # (1, H)

    ph = jnp.dot(h, wch_t, preferred_element_type=jnp.float32) + bc_ref[...]   # (B, H)

    lane_ids = jax.lax.broadcasted_iota(jnp.int32, (1, L), 1)             # (1, L)
    e_bl = jnp.zeros((B, L), jnp.float32)
    for l in range(L):                                                    # static, small L
        pe = jnp.dot(enc[l], wce_t, preferred_element_type=jnp.float32)   # (B, H)
        energy = jnp.tanh(ph + pe)                                        # (B, H)
        score_l = jnp.sum(v * energy, axis=1, keepdims=True)              # (B, 1)
        # scatter the column into lane l (pure VPU select; avoids cross-lane concat)
        e_bl = e_bl + jnp.where(lane_ids == l, score_l, 0.0)
    out_ref[...] = _row_softmax(e_bl)                                     # (B, L)


_KERNELS = {"dot": _attn_dot_kernel,
            "general": _attn_general_kernel,
            "concat": _attn_concat_kernel}


# --------------------------------- wrapper ------------------------------------

def attn_forward(method, hidden, encoder_outputs, params=None):
    """hidden: (1,B,H), encoder_outputs: (L,B,H)  ->  (B,1,L) softmax attention weights."""
    if method not in _KERNELS:
        raise ValueError(method, "is not an appropriate attention method.")
    L, B, _ = encoder_outputs.shape

    if method == "dot":
        args = (hidden, encoder_outputs)
    elif method == "general":
        args = (hidden, encoder_outputs, params["w_attn"], params["b_attn"])
    else:  # concat
        args = (hidden, encoder_outputs, params["w_attn"], params["b_attn"], params["v"])

    vmem = pl.BlockSpec(memory_space=pltpu.MemorySpace.VMEM)
    out = pl.pallas_call(
        _KERNELS[method],
        out_shape=jax.ShapeDtypeStruct((B, L), jnp.float32),
        in_specs=[vmem] * len(args),
        out_specs=vmem,
    )(*args)
    return out[:, None, :]            # unsqueeze(1): zero-copy unit-dim reshape


# ------------------------- params + pure-JAX reference ------------------------

def init_params(key, method, hidden_size):
    """Params stored once in kernel-friendly layouts (weights keep torch (out,in) layout;
    bias / v pre-reshaped to (1,H) at init time, per the perf feedback)."""
    if method == "dot":
        return {}
    H = hidden_size
    k_w, k_b, k_v = jax.random.split(key, 3)
    in_features = H if method == "general" else 2 * H
    bound = 1.0 / (in_features ** 0.5)
    params = {
        "w_attn": jax.random.uniform(k_w, (H, in_features), jnp.float32, -bound, bound),
        "b_attn": jax.random.uniform(k_b, (1, H), jnp.float32, -bound, bound),
    }
    if method == "concat":
        # torch.FloatTensor(H) is uninitialized in the spec; use a normal init here.
        params["v"] = jax.random.normal(k_v, (1, H), jnp.float32)
    return params


def attn_reference(method, hidden, encoder_outputs, params):
    """Pure-JAX mirror of the PyTorch Attn.forward (for correctness checking)."""
    if method == "dot":
        e = jnp.sum(hidden * encoder_outputs, axis=2)                                # (L, B)
    elif method == "general":
        energy = jnp.einsum("lbi,ki->lbk", encoder_outputs, params["w_attn"]) + params["b_attn"][0]
        e = jnp.sum(hidden * energy, axis=2)
    else:  # concat
        h_exp = jnp.broadcast_to(hidden, encoder_outputs.shape)
        cat = jnp.concatenate([h_exp, encoder_outputs], axis=2)                      # (L, B, 2H)
        energy = jnp.tanh(jnp.einsum("lbi,ki->lbk", cat, params["w_attn"]) + params["b_attn"][0])
        e = jnp.sum(params["v"][0] * energy, axis=2)
    return jax.nn.softmax(e.T, axis=1)[:, None, :]                                   # (B, 1, L)


# ----------------------------------- demo -------------------------------------

if __name__ == "__main__":
    B, L, H = 8, 16, 128          # small, sublane/lane-aligned demo shapes

    key = jax.random.PRNGKey(0)
    k_hid, k_enc, k_par = jax.random.split(key, 3)
    hidden = jax.random.normal(k_hid, (1, B, H), jnp.float32)            # (1, B, H)
    encoder_outputs = jax.random.normal(k_enc, (L, B, H), jnp.float32)   # (L, B, H)

    fwd = jax.jit(attn_forward, static_argnums=0)

    for method in ("dot", "general", "concat"):
        params = init_params(k_par, method, H)
        out = fwd(method, hidden, encoder_outputs, params)
        jax.block_until_ready(out)

        ref = attn_reference(method, hidden, encoder_outputs, params)
        assert out.shape == (B, 1, L), (method, out.shape)
        # generous tolerance: softmax denominator uses the hardware approx reciprocal
        assert jnp.allclose(out, ref, rtol=2e-2, atol=2e-3), method
        assert jnp.allclose(jnp.sum(out, axis=2), 1.0, atol=1e-2), method

    print("KERNEL_OK")
</pallas_src>

<mosaic_0001>
module attributes {stable_mosaic.version = 11 : i64} {
  func.func @_attn_dot_kernel(%arg0: memref<1x8x128xf32, #tpu.memory_space<vmem>>, %arg1: memref<16x8x128xf32, #tpu.memory_space<vmem>>, %arg2: memref<8x16xf32, #tpu.memory_space<vmem>>) attributes {dimension_semantics = [], scalar_prefetch = 0 : i64, scratch_operands = 0 : i64, tpu.core_type = #tpu.core_type<tc>} {
    %c0 = arith.constant 0 : index
    %c0_0 = arith.constant 0 : index
    %c0_1 = arith.constant 0 : index
    %0 = vector.load %arg0[%c0, %c0_0, %c0_1] : memref<1x8x128xf32, #tpu.memory_space<vmem>>, vector<1x8x128xf32>
    %1 = vector.shape_cast %0 : vector<1x8x128xf32> to vector<8x128xf32>
    %c0_2 = arith.constant 0 : index
    %c0_3 = arith.constant 0 : index
    %c0_4 = arith.constant 0 : index
    %2 = vector.load %arg1[%c0_2, %c0_3, %c0_4] : memref<16x8x128xf32, #tpu.memory_space<vmem>>, vector<16x8x128xf32>
    %3 = vector.shape_cast %1 : vector<8x128xf32> to vector<1x8x128xf32>
    %4 = vector.broadcast %3 : vector<1x8x128xf32> to vector<16x8x128xf32>
    %5 = arith.mulf %2, %4 : vector<16x8x128xf32>
    %cst = arith.constant dense<0.000000e+00> : vector<16x8xf32>
    %6 = vector.multi_reduction <add>, %5, %cst [2] : vector<16x8x128xf32> to vector<16x8xf32>
    %7 = tpu.transpose %6, [1, 0] : vector<16x8xf32> -> vector<8x16xf32>
    %cst_5 = arith.constant dense<0xFF800000> : vector<8xf32>
    %8 = vector.multi_reduction <maximumf>, %7, %cst_5 [1] : vector<8x16xf32> to vector<8xf32>
    %9 = vector.shape_cast %8 : vector<8xf32> to vector<8x1xf32>
    %10 = vector.broadcast %9 : vector<8x1xf32> to vector<8x16xf32>
    %11 = arith.subf %7, %10 : vector<8x16xf32>
    %12 = math.exp %11 : vector<8x16xf32>
    %cst_6 = arith.constant dense<0.000000e+00> : vector<8xf32>
    %13 = vector.multi_reduction <add>, %12, %cst_6 [1] : vector<8x16xf32> to vector<8xf32>
    %14 = vector.shape_cast %13 : vector<8xf32> to vector<8x1xf32>
    %15 = tpu.reciprocal %14 {approx = true} : vector<8x1xf32> -> vector<8x1xf32>
    %16 = vector.broadcast %15 : vector<8x1xf32> to vector<8x16xf32>
    %17 = arith.mulf %12, %16 : vector<8x16xf32>
    %c0_7 = arith.constant 0 : index
    %c0_8 = arith.constant 0 : index
    %18 = vector.load %arg2[%c0_7, %c0_8] : memref<8x16xf32, #tpu.memory_space<vmem>>, vector<8x16xf32>
    tpu.vector_store %arg2[%c0_7, %c0_8], %17 {strides = array<i32>} : memref<8x16xf32, #tpu.memory_space<vmem>>, vector<8x16xf32>,
    return
  }
}

</mosaic_0001>

<llo_original>
// kernel: attn_forward.1
$region0: #{attn_forward.1}
  #allocation0 [shape = 'u32[]', space=smem, size = 0x4, offset = 0x4, fixed_abs, tag = 'smem constant byte address 0x4 - core index']
  #allocation1 [shape = 'u32[144,128]{1,0:T(1,128)}', space=vmem, size = 0x12000, scoped, tag = 'internal scratch']
  %s0 = inlined_call_operand.hbm [shape: f32[1,8,128], index: 0, kind: input, shape index: {}]
  %s1 = inlined_call_operand.hbm [shape: f32[16,8,128], index: 1, kind: input, shape index: {}]
  %s2 = inlined_call_operand.hbm [shape: f32[8,16], index: 2, kind: output, shape index: {}]
  %s3 = sld [smem:[#allocation0]]
  $region26: #{attn_forward.1} parent=0
    _
  %s5 = ssub.s32 1, %s3
  %s6 = scalar_select 0, %s5, %s3
  $region1: #{attn_forward.1} parent=0
    #allocation2 [shape = 'u8[4096]{0}', space=vmem, size = 0x1000, scoped, tag = 'input window, operand 0, single buffered']
    #allocation3 [shape = 's32[1]{0}', space=sflag, size = 0x4, scoped, tag = 'scoped memory for attn_forward.1']
    #allocation4 [shape = 's32[1]{0}', space=sflag, size = 0x4, scoped, tag = 'scoped memory for attn_forward.1']
    #allocation5 [shape = 'u8[65536]{0}', space=vmem, size = 0x10000, scoped, tag = 'input window, operand 1, single buffered']
    #allocation6 [shape = 's32[1]{0}', space=sflag, size = 0x4, scoped, tag = 'scoped memory for attn_forward.1']
    #allocation7 [shape = 'u8[4096]{0}', space=vmem, size = 0x1000, scoped, tag = 'output window, operand 0, single buffered']
    %7 = vsyncpa [#allocation3], 0
    %8 = vsyncpa [#allocation6], 0
    %9 = vsyncpa [#allocation4], 0
    // Predicated region
    $region2: #{attn_forward.1} parent=1 // pred_check
      _
    $region3: #{attn_forward.1} parent=1 // pred_check_branch
      %11 = sbr.rel (0) target = $region5
    $region4: #{attn_forward.1} parent=1 // pred_region
      %s13 = ssub.s32 128, 128
      %14 = vsyncadd [#allocation3], %s13
      %s16 = sshll.u32 [#allocation2], 4
      %s17 = int_to_ptr.vmem [resolvable:$true] %s16
      %19 = dma.hbm_to_vmem [thread:$0]  %s0, 128, %s17, [#allocation3]
    $region5: #{attn_forward.1} parent=1 // pred_fallthru
      _
    // Predicated region
    $region6: #{attn_forward.1} parent=1 // pred_check
      _
    $region7: #{attn_forward.1} parent=1 // pred_check_branch
      %21 = sbr.rel (0) target = $region9
    $region8: #{attn_forward.1} parent=1 // pred_region
      %s23 = ssub.s32 2048, 2048
      %24 = vsyncadd [#allocation6], %s23
      %s25 = sshll.u32 [#allocation5], 4
      %s26 = int_to_ptr.vmem [resolvable:$true] %s25
      %31 = dma.hbm_to_vmem [thread:$0]  %s1, 2048, %s26, [#allocation6], 128, 128, 8
    $region9: #{attn_forward.1} parent=1 // pred_fallthru
      _
    // Predicated region
    $region10: #{attn_forward.1} parent=1 // pred_check
      _
    $region11: #{attn_forward.1} parent=1 // pred_check_branch
      %33 = sbr.rel (0) target = $region13
    $region12: #{attn_forward.1} parent=1 // pred_region
      %34 = dma.done [#allocation3], 128
    $region13: #{attn_forward.1} parent=1 // pred_fallthru
      _
    // Predicated region
    $region14: #{attn_forward.1} parent=1 // pred_check
      _
    $region15: #{attn_forward.1} parent=1 // pred_check_branch
      %36 = sbr.rel (0) target = $region17
    $region16: #{attn_forward.1} parent=1 // pred_region
      %37 = dma.done [#allocation6], 2048
    $region17: #{attn_forward.1} parent=1 // pred_fallthru
      _
    %v38 = vld [vmem:[#allocation2] sm:$0xff]
    %v39 = vld [vmem:[#allocation5] sm:$0xff]
    %v40 = vld [vmem:[#allocation5 + $0x8] sm:$0xff]
    %v41 = vld [vmem:[#allocation5 + $0x10] sm:$0xff]
    %v42 = vld [vmem:[#allocation5 + $0x18] sm:$0xff]
    %v43 = vld [vmem:[#allocation5 + $0x20] sm:$0xff]
    %v44 = vld [vmem:[#allocation5 + $0x28] sm:$0xff]
    %v45 = vld [vmem:[#allocation5 + $0x30] sm:$0xff]
    %v46 = vld [vmem:[#allocation5 + $0x38] sm:$0xff]
    %v47 = vld [vmem:[#allocation5 + $0x40] sm:$0xff]
    %v48 = vld [vmem:[#allocation5 + $0x48] sm:$0xff]
    %v49 = vld [vmem:[#allocation5 + $0x50] sm:$0xff]
    %v50 = vld [vmem:[#allocation5 + $0x58] sm:$0xff]
    %v51 = vld [vmem:[#allocation5 + $0x60] sm:$0xff]
    %v52 = vld [vmem:[#allocation5 + $0x68] sm:$0xff]
    %v53 = vld [vmem:[#allocation5 + $0x70] sm:$0xff]
    %v54 = vld [vmem:[#allocation5 + $0x78] sm:$0xff]
    %v55 = vmul.f32 %v39, %v38
    %v56 = vmul.f32 %v40, %v38
    %v57 = vmul.f32 %v41, %v38
    %v58 = vmul.f32 %v42, %v38
    %v59 = vmul.f32 %v43, %v38
    %v60 = vmul.f32 %v44, %v38
    %v61 = vmul.f32 %v45, %v38
    %v62 = vmul.f32 %v46, %v38
    %v63 = vmul.f32 %v47, %v38
    %v64 = vmul.f32 %v48, %v38
    %v65 = vmul.f32 %v49, %v38
    %v66 = vmul.f32 %v50, %v38
    %v67 = vmul.f32 %v51, %v38
    %v68 = vmul.f32 %v52, %v38
    %v69 = vmul.f32 %v53, %v38
    %v70 = vmul.f32 %v54, %v38
    %71 = vadd.xlane.f32.xlu0 %v55
    %v72 = vpop.xlane.xlu0 %71
    %73 = vadd.xlane.f32.xlu0 %v56
    %v74 = vpop.xlane.xlu0 %73
    %75 = vadd.xlane.f32.xlu0 %v57
    %v76 = vpop.xlane.xlu0 %75
    %77 = vadd.xlane.f32.xlu0 %v58
    %v78 = vpop.xlane.xlu0 %77
    %79 = vadd.xlane.f32.xlu0 %v59
    %v80 = vpop.xlane.xlu0 %79
    %81 = vadd.xlane.f32.xlu0 %v60
    %v82 = vpop.xlane.xlu0 %81
    %83 = vadd.xlane.f32.xlu0 %v61
    %v84 = vpop.xlane.xlu0 %83
    %85 = vadd.xlane.f32.xlu0 %v62
    %v86 = vpop.xlane.xlu0 %85
    %87 = vadd.xlane.f32.xlu0 %v63
    %v88 = vpop.xlane.xlu0 %87
    %89 = vadd.xlane.f32.xlu0 %v64
    %v90 = vpop.xlane.xlu0 %89
    %91 = vadd.xlane.f32.xlu0 %v65
    %v92 = vpop.xlane.xlu0 %91
    %93 = vadd.xlane.f32.xlu0 %v66
    %v94 = vpop.xlane.xlu0 %93
    %95 = vadd.xlane.f32.xlu0 %v67
    %v96 = vpop.xlane.xlu0 %95
    %97 = vadd.xlane.f32.xlu0 %v68
    %v98 = vpop.xlane.xlu0 %97
    %99 = vadd.xlane.f32.xlu0 %v69
    %v100 = vpop.xlane.xlu0 %99
    %101 = vadd.xlane.f32.xlu0 %v70
    %v102 = vpop.xlane.xlu0 %101
    %v119 = vlaneseq
    %v120 = vand.u32 %v119, 127
    %v121 = vlaneseq
    %v122 = vshrl.u32 %v121, 7
    %v123 = vsub.s32 %v120, %v122
    %v124 = vrot.slane %v72, %v123
    %v125 = vlaneseq
    %v126 = vshrl.u32 %v125, 7
    %v127 = vsub.s32 %v120, %v126
    %v128 = vrot.slane %v74, %v127
    %v129 = vlaneseq
    %v130 = vshrl.u32 %v129, 7
    %v131 = vsub.s32 %v120, %v130
    %v132 = vrot.slane %v76, %v131
    %v133 = vlaneseq
    %v134 = vshrl.u32 %v133, 7
    %v135 = vsub.s32 %v120, %v134
    %v136 = vrot.slane %v78, %v135
    %v137 = vlaneseq
    %v138 = vshrl.u32 %v137, 7
    %v139 = vsub.s32 %v120, %v138
    %v140 = vrot.slane %v80, %v139
    %v141 = vlaneseq
    %v142 = vshrl.u32 %v141, 7
    %v143 = vsub.s32 %v120, %v142
    %v144 = vrot.slane %v82, %v143
    %v145 = vlaneseq
    %v146 = vshrl.u32 %v145, 7
    %v147 = vsub.s32 %v120, %v146
    %v148 = vrot.slane %v84, %v147
    %v149 = vlaneseq
    %v150 = vshrl.u32 %v149, 7
    %v151 = vsub.s32 %v120, %v150
    %v152 = vrot.slane %v86, %v151
    %v153 = vlaneseq
    %v154 = vshrl.u32 %v153, 7
    %v155 = vsub.s32 %v120, %v154
    %v156 = vrot.slane %v88, %v155
    %v157 = vlaneseq
    %v158 = vshrl.u32 %v157, 7
    %v159 = vsub.s32 %v120, %v158
    %v160 = vrot.slane %v90, %v159
    %v161 = vlaneseq
    %v162 = vshrl.u32 %v161, 7
    %v163 = vsub.s32 %v120, %v162
    %v164 = vrot.slane %v92, %v163
    %v165 = vlaneseq
    %v166 = vshrl.u32 %v165, 7
    %v167 = vsub.s32 %v120, %v166
    %v168 = vrot.slane %v94, %v167
    %v169 = vlaneseq
    %v170 = vshrl.u32 %v169, 7
    %v171 = vsub.s32 %v120, %v170
    %v172 = vrot.slane %v96, %v171
    %v173 = vlaneseq
    %v174 = vshrl.u32 %v173, 7
    %v175 = vsub.s32 %v120, %v174
    %v176 = vrot.slane %v98, %v175
    %v177 = vlaneseq
    %v178 = vshrl.u32 %v177, 7
    %v179 = vsub.s32 %v120, %v178
    %v180 = vrot.slane %v100, %v179
    %v181 = vlaneseq
    %v182 = vshrl.u32 %v181, 7
    %v183 = vsub.s32 %v120, %v182
    %v184 = vrot.slane %v102, %v183
    %vm185 = vcmask 1041409
    %v186 = vsel %vm185, %v128, %v124
    %vm187 = vcmask 1042434
    %v188 = vsel %vm187, %v132, %v186
    %vm189 = vcmask 1043459
    %v190 = vsel %vm189, %v136, %v188
    %vm191 = vcmask 1044484
    %v192 = vsel %vm191, %v140, %v190
    %vm193 = vcmask 1045509
    %v194 = vsel %vm193, %v144, %v192
    %vm195 = vcmask 1046534
    %v196 = vsel %vm195, %v148, %v194
    %vm197 = vcmask 1047559
    %v198 = vsel %vm197, %v152, %v196
    %v199 = vsel %vm185, %v160, %v156
    %v200 = vsel %vm187, %v164, %v199
    %v201 = vsel %vm189, %v168, %v200
    %v202 = vsel %vm191, %v172, %v201
    %v203 = vsel %vm193, %v176, %v202
    %v204 = vsel %vm195, %v180, %v203
    %v205 = vsel %vm197, %v184, %v204
    %208 = vxpose.xlu0.b32.start [1/16] %v198, 128
    %209 = vxpose.xlu0.b32.cont [2/16] %v205, 128
    %210 = vxpose.xlu0.b32.cont [3/16] 0.0, 128
    %211 = vxpose.xlu0.b32.cont [4/16] 0.0, 128
    %212 = vxpose.xlu0.b32.cont [5/16] 0.0, 128
    %213 = vxpose.xlu0.b32.cont [6/16] 0.0, 128
    %214 = vxpose.xlu0.b32.cont [7/16] 0.0, 128
    %215 = vxpose.xlu0.b32.cont [8/16] 0.0, 128
    %216 = vxpose.xlu0.b32.cont [9/16] 0.0, 128
    %217 = vxpose.xlu0.b32.cont [10/16] 0.0, 128
    %218 = vxpose.xlu0.b32.cont [11/16] 0.0, 128
    %219 = vxpose.xlu0.b32.cont [12/16] 0.0, 128
    %220 = vxpose.xlu0.b32.cont [13/16] 0.0, 128
    %221 = vxpose.xlu0.b32.cont [14/16] 0.0, 128
    %222 = vxpose.xlu0.b32.cont [15/16] 0.0, 128
    %223 = vxpose.xlu0.b32.end [16/16] 0.0, 128
    %v224 = vpop.trf.xlu0
    %v225 = vpop.trf.xlu0
    %v226 = vpop.trf.xlu0
    %v227 = vpop.trf.xlu0
    %v228 = vpop.trf.xlu0
    %v229 = vpop.trf.xlu0
    %v230 = vpop.trf.xlu0
    %v231 = vpop.trf.xlu0
    %v232 = vpop.trf.xlu0
    %v233 = vpop.trf.xlu0
    %v234 = vpop.trf.xlu0
    %v235 = vpop.trf.xlu0
    %v236 = vpop.trf.xlu0
    %v237 = vpop.trf.xlu0
    %v238 = vpop.trf.xlu0
    %v239 = vpop.trf.xlu0
    %vm240 = vcmask 130048
    %v241 = vsel %vm240, %v224, -inf
    %242 = vmax.xlane.f32.xlu0 %v241
    %v243 = vpop.xlane.xlu0 %242
    %v244 = vsub.f32 %v224, %v243
    %v245 = vmul.f32 %v244, 1.442695
    %v246 = vpow.pop %v245
    %v247 = vsel %vm240, %v246, 0.0
    %248 = vadd.xlane.f32.xlu0 %v247
    %v249 = vpop.xlane.xlu0 %248
    %v250 = vrcp.pop %v249
    %v251 = vmul.f32 %v246, %v250
    %252 = vst.msk [vmem:[#allocation7] sm:$0xff] %vm240, %v251
    // Predicated region
    $region18: #{attn_forward.1} parent=1 // pred_check
      _
    $region19: #{attn_forward.1} parent=1 // pred_check_branch
      %254 = sbr.rel (0) target = $region21
    $region20: #{attn_forward.1} parent=1 // pred_region
      %s256 = ssub.s32 128, 128
      %257 = vsyncadd [#allocation4], %s256
      %s259 = sshll.u32 [#allocation7], 4
      %s260 = int_to_ptr.vmem [resolvable:$true] %s259
      %262 = dma.vmem_to_hbm [thread:$0]  %s260, 128, %s2, [#allocation4]
    $region21: #{attn_forward.1} parent=1 // pred_fallthru
      _
    // Predicated region
    $region22: #{attn_forward.1} parent=1 // pred_check
      _
    $region23: #{attn_forward.1} parent=1 // pred_check_branch
      %264 = sbr.rel (0) target = $region25
    $region24: #{attn_forward.1} parent=1 // pred_region
      %265 = dma.done [#allocation4], 128
    $region25: #{attn_forward.1} parent=1 // pred_fallthru
      _
    %266 = vsyncpa [#allocation3], 1
    %267 = vsyncpa [#allocation6], 1
    %268 = vsyncpa [#allocation4], 1

</llo_original>
